<compile_context>
chip_gen: v6e
topology: v6e:2x2x1
jax: 0.10.0
libtpu: 0.0.40
codegen_flags: <defaults>
</compile_context>

<pallas_src>
import functools

import jax
import jax.numpy as jnp
from jax.experimental import pallas as pl
from jax.experimental.pallas import tpu as pltpu

_BF16 = jnp.bfloat16


# ----------------------------------------------------------------------------
# Small helpers
# ----------------------------------------------------------------------------
def _round_up(x, m):
    return (x + m - 1) // m * m


def _vmem_limit_bytes():
    # Generation-aware scoped-VMEM budget: half of physical VMEM, clamped to [32, 96] MiB.
    cap = 128 * 1024 * 1024
    try:
        info = pltpu.get_tpu_info()
        cap = int(getattr(info, "vmem_capacity_bytes", cap))
    except Exception:
        pass
    return max(32 * 1024 * 1024, min(cap // 2, 96 * 1024 * 1024))


def _compiler_params():
    return pltpu.CompilerParams(
        dimension_semantics=("parallel",),
        vmem_limit_bytes=_vmem_limit_bytes(),
    )


# ----------------------------------------------------------------------------
# Pallas kernels
# ----------------------------------------------------------------------------
def _gemm_bn_kernel(x_ref, w_ref, scale_ref, bias_ref, out_ref, *, relu):
    # x:(TM,K) bf16, w:(K,N) bf16, scale/bias:(1,N) f32 -> out:(TM,N)
    acc = jnp.dot(x_ref[...], w_ref[...], preferred_element_type=jnp.float32)
    y = acc * scale_ref[...] + bias_ref[...]
    if relu:
        y = jnp.maximum(y, 0.0)
    out_ref[...] = y.astype(out_ref.dtype)


def _tail_conv_sc_kernel(h_ref, w3_ref, s3_ref, b3_ref,
                         xs_ref, ws_ref, ss_ref, bs_ref, out_ref):
    # Fused: bn3(conv3(h)) + bn_sc(conv_sc(x_strided)) -> relu
    y = jnp.dot(h_ref[...], w3_ref[...], preferred_element_type=jnp.float32)
    y = y * s3_ref[...] + b3_ref[...]
    r = jnp.dot(xs_ref[...], ws_ref[...], preferred_element_type=jnp.float32)
    r = r * ss_ref[...] + bs_ref[...]
    out_ref[...] = jnp.maximum(y + r, 0.0).astype(out_ref.dtype)


def _tail_id_kernel(h_ref, w3_ref, s3_ref, b3_ref, res_ref, out_ref):
    # Fused: bn3(conv3(h)) + identity residual -> relu
    y = jnp.dot(h_ref[...], w3_ref[...], preferred_element_type=jnp.float32)
    y = y * s3_ref[...] + b3_ref[...] + res_ref[...]
    out_ref[...] = jnp.maximum(y, 0.0).astype(out_ref.dtype)


# ----------------------------------------------------------------------------
# Pallas call wrappers (grid over M rows, bf16 operands, f32 accumulation)
# ----------------------------------------------------------------------------
def _gemm_bn(x, w, scale, bias, *, relu, out_dtype, tm=512):
    m, k = x.shape
    n = w.shape[1]
    tm = min(tm, _round_up(m, 8))
    m_pad = _round_up(m, tm)

    xb = x.astype(_BF16)
    if m_pad != m:
        xb = jnp.pad(xb, ((0, m_pad - m), (0, 0)))
    wb = w.astype(_BF16)

    out_isz = jnp.dtype(out_dtype).itemsize
    cost = pl.CostEstimate(
        flops=int(2 * m_pad * k * n),
        transcendentals=0,
        bytes_accessed=int(2 * m_pad * k + 2 * k * n + 8 * n + out_isz * m_pad * n),
    )
    out = pl.pallas_call(
        functools.partial(_gemm_bn_kernel, relu=relu),
        grid=(m_pad // tm,),
        in_specs=[
            pl.BlockSpec((tm, k), lambda i: (i, 0)),
            pl.BlockSpec((k, n), lambda i: (0, 0)),
            pl.BlockSpec((1, n), lambda i: (0, 0)),
            pl.BlockSpec((1, n), lambda i: (0, 0)),
        ],
        out_specs=pl.BlockSpec((tm, n), lambda i: (i, 0)),
        out_shape=jax.ShapeDtypeStruct((m_pad, n), out_dtype),
        compiler_params=_compiler_params(),
        cost_estimate=cost,
    )(xb, wb, scale, bias)
    return out[:m]


def _tail_conv_shortcut(h, w3, s3, b3, xs, ws, ss, bs, *, tm=512):
    m, k1 = h.shape
    k2 = xs.shape[1]
    n = w3.shape[1]
    tm = min(tm, _round_up(m, 8))
    m_pad = _round_up(m, tm)

    hb = h.astype(_BF16)
    xsb = xs.astype(_BF16)
    if m_pad != m:
        hb = jnp.pad(hb, ((0, m_pad - m), (0, 0)))
        xsb = jnp.pad(xsb, ((0, m_pad - m), (0, 0)))
    w3b = w3.astype(_BF16)
    wsb = ws.astype(_BF16)

    cost = pl.CostEstimate(
        flops=int(2 * m_pad * (k1 + k2) * n),
        transcendentals=0,
        bytes_accessed=int(2 * m_pad * (k1 + k2) + 2 * (k1 + k2) * n + 16 * n + 4 * m_pad * n),
    )
    out = pl.pallas_call(
        _tail_conv_sc_kernel,
        grid=(m_pad // tm,),
        in_specs=[
            pl.BlockSpec((tm, k1), lambda i: (i, 0)),
            pl.BlockSpec((k1, n), lambda i: (0, 0)),
            pl.BlockSpec((1, n), lambda i: (0, 0)),
            pl.BlockSpec((1, n), lambda i: (0, 0)),
            pl.BlockSpec((tm, k2), lambda i: (i, 0)),
            pl.BlockSpec((k2, n), lambda i: (0, 0)),
            pl.BlockSpec((1, n), lambda i: (0, 0)),
            pl.BlockSpec((1, n), lambda i: (0, 0)),
        ],
        out_specs=pl.BlockSpec((tm, n), lambda i: (i, 0)),
        out_shape=jax.ShapeDtypeStruct((m_pad, n), jnp.float32),
        compiler_params=_compiler_params(),
        cost_estimate=cost,
    )(hb, w3b, s3, b3, xsb, wsb, ss, bs)
    return out[:m]


def _tail_identity(h, w3, s3, b3, res, *, tm=512):
    m, k1 = h.shape
    n = w3.shape[1]
    tm = min(tm, _round_up(m, 8))
    m_pad = _round_up(m, tm)

    hb = h.astype(_BF16)
    resf = res.astype(jnp.float32)
    if m_pad != m:
        hb = jnp.pad(hb, ((0, m_pad - m), (0, 0)))
        resf = jnp.pad(resf, ((0, m_pad - m), (0, 0)))
    w3b = w3.astype(_BF16)

    cost = pl.CostEstimate(
        flops=int(2 * m_pad * k1 * n),
        transcendentals=0,
        bytes_accessed=int(2 * m_pad * k1 + 2 * k1 * n + 8 * n + 8 * m_pad * n),
    )
    out = pl.pallas_call(
        _tail_id_kernel,
        grid=(m_pad // tm,),
        in_specs=[
            pl.BlockSpec((tm, k1), lambda i: (i, 0)),
            pl.BlockSpec((k1, n), lambda i: (0, 0)),
            pl.BlockSpec((1, n), lambda i: (0, 0)),
            pl.BlockSpec((1, n), lambda i: (0, 0)),
            pl.BlockSpec((tm, n), lambda i: (i, 0)),
        ],
        out_specs=pl.BlockSpec((tm, n), lambda i: (i, 0)),
        out_shape=jax.ShapeDtypeStruct((m_pad, n), jnp.float32),
        compiler_params=_compiler_params(),
        cost_estimate=cost,
    )(hb, w3b, s3, b3, resf)
    return out[:m]


# ----------------------------------------------------------------------------
# JAX glue: im2col patch extraction for the single 3x3 conv (data movement only)
# ----------------------------------------------------------------------------
def _im2col(x, ksize, stride, padding):
    n, h, w, c = x.shape
    ho = (h + 2 * padding - ksize) // stride + 1
    wo = (w + 2 * padding - ksize) // stride + 1
    xp = jnp.pad(x, ((0, 0), (padding, padding), (padding, padding), (0, 0)))
    cols = []
    for ky in range(ksize):
        for kx in range(ksize):
            patch = xp[:,
                       ky:ky + (ho - 1) * stride + 1:stride,
                       kx:kx + (wo - 1) * stride + 1:stride, :]
            cols.append(patch)
    patches = jnp.concatenate(cols, axis=-1)                 # (N, Ho, Wo, 9*C)
    return patches.reshape(n * ho * wo, ksize * ksize * c), (n, ho, wo)


# ----------------------------------------------------------------------------
# Deterministic parameters (inference-mode BatchNorm folded into scale/bias)
# ----------------------------------------------------------------------------
def _bn_fold(key, c, eps=1e-5):
    k1, k2, k3, k4 = jax.random.split(key, 4)
    gamma = 1.0 + 0.1 * jax.random.normal(k1, (c,), jnp.float32)
    beta = 0.1 * jax.random.normal(k2, (c,), jnp.float32)
    mean = 0.1 * jax.random.normal(k3, (c,), jnp.float32)
    var = 1.0 + 0.1 * jnp.abs(jax.random.normal(k4, (c,), jnp.float32))
    scale = gamma / jnp.sqrt(var + eps)
    bias = beta - mean * scale
    return scale.reshape(1, c), bias.reshape(1, c)


def _conv1x1_params(key, cin, cout):
    kw, kb = jax.random.split(key)
    w = jax.random.normal(kw, (cin, cout), jnp.float32) * (2.0 / cin) ** 0.5 * 0.5
    s, b = _bn_fold(kb, cout)
    return {"w": w, "scale": s, "bias": b}


def _conv3x3_params(key, cin, cout):
    kw, kb = jax.random.split(key)
    fan_in = 9 * cin
    w = jax.random.normal(kw, (3, 3, cin, cout), jnp.float32) * (2.0 / fan_in) ** 0.5 * 0.5
    s, b = _bn_fold(kb, cout)
    return {"w": w, "scale": s, "bias": b}


def make_bottleneck_params(key, in_planes, planes, stride, expansion=4):
    cout = expansion * planes
    k1, k2, k3, k4 = jax.random.split(key, 4)
    params = {
        "conv1": _conv1x1_params(k1, in_planes, planes),
        "conv2": _conv3x3_params(k2, planes, planes),
        "conv3": _conv1x1_params(k3, planes, cout),
    }
    if stride != 1 or in_planes != cout:
        params["shortcut"] = _conv1x1_params(k4, in_planes, cout)
    return params


# ----------------------------------------------------------------------------
# Bottleneck forward (mirrors the PyTorch module; NCHW in / NCHW out)
# ----------------------------------------------------------------------------
def bottleneck_forward(params, x_nchw, stride):
    x = jnp.transpose(x_nchw.astype(jnp.float32), (0, 2, 3, 1))   # NCHW -> NHWC
    n, h, w, cin = x.shape
    p1, p2, p3 = params["conv1"], params["conv2"], params["conv3"]
    planes = p1["w"].shape[-1]
    cout = p3["w"].shape[-1]

    # conv1 (1x1) + bn1 + relu  -> bf16 intermediate
    h1 = _gemm_bn(x.reshape(n * h * w, cin), p1["w"], p1["scale"], p1["bias"],
                  relu=True, out_dtype=_BF16)
    h1 = h1.reshape(n, h, w, planes)

    # conv2 (3x3, stride, pad=1) + bn2 + relu  (im2col glue + fused GEMM)
    cols, (n, ho, wo) = _im2col(h1, 3, stride, 1)
    h2 = _gemm_bn(cols, p2["w"].reshape(9 * planes, planes), p2["scale"], p2["bias"],
                  relu=True, out_dtype=_BF16)

    # conv3 (1x1) + bn3 + shortcut + add + relu, fused into a single kernel
    if "shortcut" in params:
        ps = params["shortcut"]
        xs = x[:, ::stride, ::stride, :].reshape(n * ho * wo, cin)   # 1x1 stride-s conv input
        out = _tail_conv_shortcut(h2, p3["w"], p3["scale"], p3["bias"],
                                  xs, ps["w"], ps["scale"], ps["bias"])
    else:
        res = x.reshape(n * ho * wo, cout)                           # identity residual
        out = _tail_identity(h2, p3["w"], p3["scale"], p3["bias"], res)

    out = out.reshape(n, ho, wo, cout)
    return jnp.transpose(out, (0, 3, 1, 2))                          # NHWC -> NCHW


# ----------------------------------------------------------------------------
# Pure-JAX reference (f32) for a correctness sanity check
# ----------------------------------------------------------------------------
def bottleneck_reference(params, x_nchw, stride):
    x = jnp.transpose(x_nchw.astype(jnp.float32), (0, 2, 3, 1))
    p1, p2, p3 = params["conv1"], params["conv2"], params["conv3"]

    def bn(y, p):
        return y * p["scale"].reshape(1, 1, 1, -1) + p["bias"].reshape(1, 1, 1, -1)

    def conv1x1(y, w, s):
        return jax.lax.conv_general_dilated(
            y, w.reshape(1, 1, *w.shape), (s, s), "VALID",
            dimension_numbers=("NHWC", "HWIO", "NHWC"))

    h = jax.nn.relu(bn(conv1x1(x, p1["w"], 1), p1))
    h = jax.lax.conv_general_dilated(
        h, p2["w"], (stride, stride), ((1, 1), (1, 1)),
        dimension_numbers=("NHWC", "HWIO", "NHWC"))
    h = jax.nn.relu(bn(h, p2))
    h = bn(conv1x1(h, p3["w"], 1), p3)
    if "shortcut" in params:
        ps = params["shortcut"]
        r = bn(conv1x1(x, ps["w"], stride), ps)
    else:
        r = x
    out = jax.nn.relu(h + r)
    return jnp.transpose(out, (0, 3, 1, 2))


if __name__ == "__main__":
    key = jax.random.PRNGKey(0)
    kp1, kp2, kx = jax.random.split(key, 3)

    batch, in_planes, planes, hw = 2, 64, 16, 16      # expansion*planes == 64 == in_planes
    x = jax.random.normal(kx, (batch, in_planes, hw, hw), jnp.float32)   # NCHW like PyTorch

    # stride=2 -> conv+BN shortcut path (fused-shortcut kernel);
    # stride=1 -> identity shortcut path (identity-residual kernel).
    for stride, kp in ((2, kp1), (1, kp2)):
        params = make_bottleneck_params(kp, in_planes, planes, stride)
        out = jax.block_until_ready(bottleneck_forward(params, x, stride))
        ref = jax.block_until_ready(bottleneck_reference(params, x, stride))
        assert out.shape == ref.shape
        assert bool(jnp.all(jnp.isfinite(out)))
        err = float(jnp.max(jnp.abs(out - ref)))
        scl = float(jnp.max(jnp.abs(ref))) + 1e-6
        assert err / scl < 0.08, (stride, err, scl)   # bf16-operand / f32-accum tolerance

    print("KERNEL_OK")
</pallas_src>

<mosaic_0001>
module attributes {stable_mosaic.version = 11 : i64} {
  func.func @_gemm_bn_kernel(%arg0: i32, %arg1: memref<512x64xbf16, #tpu.memory_space<vmem>>, %arg2: memref<64x16xbf16, #tpu.memory_space<vmem>>, %arg3: memref<1x16xf32, #tpu.memory_space<vmem>>, %arg4: memref<1x16xf32, #tpu.memory_space<vmem>>, %arg5: memref<512x16xbf16, #tpu.memory_space<vmem>>) attributes {dimension_semantics = [#tpu.dimension_semantics<parallel>], iteration_bounds = array<i64: 1>, scalar_prefetch = 0 : i64, scratch_operands = 0 : i64, tpu.core_type = #tpu.core_type<tc>, window_params = [{transform_indices = @transform_0, window_bounds = array<i64: 512, 64>}, {pipeline_mode = #tpu.pipeline_mode<synchronous>, transform_indices = @transform_1, window_bounds = array<i64: 64, 16>}, {pipeline_mode = #tpu.pipeline_mode<synchronous>, transform_indices = @transform_2, window_bounds = array<i64: 1, 16>}, {pipeline_mode = #tpu.pipeline_mode<synchronous>, transform_indices = @transform_3, window_bounds = array<i64: 1, 16>}, {transform_indices = @transform_4, window_bounds = array<i64: 512, 16>}]} {
    %c0 = arith.constant 0 : index
    %c0_0 = arith.constant 0 : index
    %0 = vector.load %arg1[%c0, %c0_0] : memref<512x64xbf16, #tpu.memory_space<vmem>>, vector<512x64xbf16>
    %c0_1 = arith.constant 0 : index
    %c0_2 = arith.constant 0 : index
    %1 = vector.load %arg2[%c0_1, %c0_2] : memref<64x16xbf16, #tpu.memory_space<vmem>>, vector<64x16xbf16>
    %cst = arith.constant dense<0.000000e+00> : vector<512x16xf32>
    %2 = tpu.matmul %0, %1, %cst {dimension_numbers = #tpu.dot_dimension_numbers<[1], [0], [0], [1], [0, 0, 1, 1], [], []>} : vector<512x64xbf16>, vector<64x16xbf16>, vector<512x16xf32> -> vector<512x16xf32>
    %c0_3 = arith.constant 0 : index
    %c0_4 = arith.constant 0 : index
    %3 = vector.load %arg3[%c0_3, %c0_4] : memref<1x16xf32, #tpu.memory_space<vmem>>, vector<1x16xf32>
    %4 = vector.broadcast %3 : vector<1x16xf32> to vector<512x16xf32>
    %5 = arith.mulf %2, %4 : vector<512x16xf32>
    %c0_5 = arith.constant 0 : index
    %c0_6 = arith.constant 0 : index
    %6 = vector.load %arg4[%c0_5, %c0_6] : memref<1x16xf32, #tpu.memory_space<vmem>>, vector<1x16xf32>
    %7 = vector.broadcast %6 : vector<1x16xf32> to vector<512x16xf32>
    %8 = arith.addf %5, %7 : vector<512x16xf32>
    %cst_7 = arith.constant 0.000000e+00 : f32
    %9 = vector.broadcast %cst_7 : f32 to vector<512x16xf32>
    %10 = arith.maximumf %8, %9 : vector<512x16xf32>
    %11 = arith.truncf %10 : vector<512x16xf32> to vector<512x16xbf16>
    %c0_8 = arith.constant 0 : index
    %c0_9 = arith.constant 0 : index
    %12 = vector.load %arg5[%c0_8, %c0_9] : memref<512x16xbf16, #tpu.memory_space<vmem>>, vector<512x16xbf16>
    tpu.vector_store %arg5[%c0_8, %c0_9], %11 {strides = array<i32>} : memref<512x16xbf16, #tpu.memory_space<vmem>>, vector<512x16xbf16>,
    return
  }
  func.func @transform_0(%arg0: i32) -> (i32, i32) {
    %c0_i32 = arith.constant 0 : i32
    %c0_i32_0 = arith.constant 0 : i32
    return %arg0, %c0_i32 : i32, i32
  }
  func.func @transform_1(%arg0: i32) -> (i32, i32) {
    %c0_i32 = arith.constant 0 : i32
    %c0_i32_0 = arith.constant 0 : i32
    %c0_i32_1 = arith.constant 0 : i32
    return %c0_i32, %c0_i32_0 : i32, i32
  }
  func.func @transform_2(%arg0: i32) -> (i32, i32) {
    %c0_i32 = arith.constant 0 : i32
    %c0_i32_0 = arith.constant 0 : i32
    %c0_i32_1 = arith.constant 0 : i32
    return %c0_i32, %c0_i32_0 : i32, i32
  }
  func.func @transform_3(%arg0: i32) -> (i32, i32) {
    %c0_i32 = arith.constant 0 : i32
    %c0_i32_0 = arith.constant 0 : i32
    %c0_i32_1 = arith.constant 0 : i32
    return %c0_i32, %c0_i32_0 : i32, i32
  }
  func.func @transform_4(%arg0: i32) -> (i32, i32) {
    %c0_i32 = arith.constant 0 : i32
    %c0_i32_0 = arith.constant 0 : i32
    return %arg0, %c0_i32 : i32, i32
  }
}

</mosaic_0001>

<llo_original>
// kernel: tpu_custom_call.1
$region0: #{tpu_custom_call.1}
  #allocation0 [shape = 'u32[]', space=smem, size = 0x4, offset = 0x4, fixed_abs, tag = 'smem constant byte address 0x4 - core index']
  #allocation1 [shape = 'u32[144,128]{1,0:T(1,128)}', space=vmem, size = 0x12000, scoped, tag = 'internal scratch']
  %s0 = inlined_call_operand.vmem [shape: bf16[512,64], index: 0, kind: input, shape index: {}]
  %s1 = inlined_call_operand.vmem [shape: bf16[64,16], index: 1, kind: input, shape index: {}]
  %s2 = inlined_call_operand.vmem [shape: f32[1,16], index: 2, kind: input, shape index: {}]
  %s3 = inlined_call_operand.vmem [shape: f32[1,16], index: 3, kind: input, shape index: {}]
  %s4 = inlined_call_operand.vmem [shape: bf16[512,16], index: 4, kind: output, shape index: {}]
  %s5 = sld [smem:[#allocation0]]
  $region26: #{tpu_custom_call.1} parent=0
    _
  %s7 = ssub.s32 1, %s5
  %s8 = scalar_select 0, %s7, %s5
  // Predicated region
  $region2: #{tpu_custom_call.1} parent=0 // pred_check
    _
  $region3: #{tpu_custom_call.1} parent=0 // pred_check_branch
    %10 = sbr.rel (0) target = $region5
  $region4: #{tpu_custom_call.1} parent=0 // pred_region
    _
  $region5: #{tpu_custom_call.1} parent=0 // pred_fallthru
    _
  // Predicated region
  $region6: #{tpu_custom_call.1} parent=0 // pred_check
    _
  $region7: #{tpu_custom_call.1} parent=0 // pred_check_branch
    %12 = sbr.rel (0) target = $region9
  $region8: #{tpu_custom_call.1} parent=0 // pred_region
    _
  $region9: #{tpu_custom_call.1} parent=0 // pred_fallthru
    _
  // Predicated region
  $region10: #{tpu_custom_call.1} parent=0 // pred_check
    _
  $region11: #{tpu_custom_call.1} parent=0 // pred_check_branch
    %14 = sbr.rel (0) target = $region13
  $region12: #{tpu_custom_call.1} parent=0 // pred_region
    _
  $region13: #{tpu_custom_call.1} parent=0 // pred_fallthru
    _
  // Predicated region
  $region14: #{tpu_custom_call.1} parent=0 // pred_check
    _
  $region15: #{tpu_custom_call.1} parent=0 // pred_check_branch
    %16 = sbr.rel (0) target = $region17
  $region16: #{tpu_custom_call.1} parent=0 // pred_region
    _
  $region17: #{tpu_custom_call.1} parent=0 // pred_fallthru
    _
  %v18 = vld [vmem:[%s0] sm:$0xf]
  %v19 = vld [vmem:[%s0 + $0x4] sm:$0xf]
  %v20 = vld [vmem:[%s0 + $0x8] sm:$0xf]
  %v21 = vld [vmem:[%s0 + $0xc] sm:$0xf]
  %v22 = vld [vmem:[%s0 + $0x10] sm:$0xf]
  %v23 = vld [vmem:[%s0 + $0x14] sm:$0xf]
  %v24 = vld [vmem:[%s0 + $0x18] sm:$0xf]
  %v25 = vld [vmem:[%s0 + $0x1c] sm:$0xf]
  %v26 = vld [vmem:[%s0 + $0x20] sm:$0xf]
  %v27 = vld [vmem:[%s0 + $0x24] sm:$0xf]
  %v28 = vld [vmem:[%s0 + $0x28] sm:$0xf]
  %v29 = vld [vmem:[%s0 + $0x2c] sm:$0xf]
  %v30 = vld [vmem:[%s0 + $0x30] sm:$0xf]
  %v31 = vld [vmem:[%s0 + $0x34] sm:$0xf]
  %v32 = vld [vmem:[%s0 + $0x38] sm:$0xf]
  %v33 = vld [vmem:[%s0 + $0x3c] sm:$0xf]
  %v34 = vld [vmem:[%s0 + $0x40] sm:$0xf]
  %v35 = vld [vmem:[%s0 + $0x44] sm:$0xf]
  %v36 = vld [vmem:[%s0 + $0x48] sm:$0xf]
  %v37 = vld [vmem:[%s0 + $0x4c] sm:$0xf]
  %v38 = vld [vmem:[%s0 + $0x50] sm:$0xf]
  %v39 = vld [vmem:[%s0 + $0x54] sm:$0xf]
  %v40 = vld [vmem:[%s0 + $0x58] sm:$0xf]
  %v41 = vld [vmem:[%s0 + $0x5c] sm:$0xf]
  %v42 = vld [vmem:[%s0 + $0x60] sm:$0xf]
  %v43 = vld [vmem:[%s0 + $0x64] sm:$0xf]
  %v44 = vld [vmem:[%s0 + $0x68] sm:$0xf]
  %v45 = vld [vmem:[%s0 + $0x6c] sm:$0xf]
  %v46 = vld [vmem:[%s0 + $0x70] sm:$0xf]
  %v47 = vld [vmem:[%s0 + $0x74] sm:$0xf]
  %v48 = vld [vmem:[%s0 + $0x78] sm:$0xf]
  %v49 = vld [vmem:[%s0 + $0x7c] sm:$0xf]
  %v50 = vld [vmem:[%s0 + $0x80] sm:$0xf]
  %v51 = vld [vmem:[%s0 + $0x84] sm:$0xf]
  %v52 = vld [vmem:[%s0 + $0x88] sm:$0xf]
  %v53 = vld [vmem:[%s0 + $0x8c] sm:$0xf]
  %v54 = vld [vmem:[%s0 + $0x90] sm:$0xf]
  %v55 = vld [vmem:[%s0 + $0x94] sm:$0xf]
  %v56 = vld [vmem:[%s0 + $0x98] sm:$0xf]
  %v57 = vld [vmem:[%s0 + $0x9c] sm:$0xf]
  %v58 = vld [vmem:[%s0 + $0xa0] sm:$0xf]
  %v59 = vld [vmem:[%s0 + $0xa4] sm:$0xf]
  %v60 = vld [vmem:[%s0 + $0xa8] sm:$0xf]
  %v61 = vld [vmem:[%s0 + $0xac] sm:$0xf]
  %v62 = vld [vmem:[%s0 + $0xb0] sm:$0xf]
  %v63 = vld [vmem:[%s0 + $0xb4] sm:$0xf]
  %v64 = vld [vmem:[%s0 + $0xb8] sm:$0xf]
  %v65 = vld [vmem:[%s0 + $0xbc] sm:$0xf]
  %v66 = vld [vmem:[%s0 + $0xc0] sm:$0xf]
  %v67 = vld [vmem:[%s0 + $0xc4] sm:$0xf]
  %v68 = vld [vmem:[%s0 + $0xc8] sm:$0xf]
  %v69 = vld [vmem:[%s0 + $0xcc] sm:$0xf]
  %v70 = vld [vmem:[%s0 + $0xd0] sm:$0xf]
  %v71 = vld [vmem:[%s0 + $0xd4] sm:$0xf]
  %v72 = vld [vmem:[%s0 + $0xd8] sm:$0xf]
  %v73 = vld [vmem:[%s0 + $0xdc] sm:$0xf]
  %v74 = vld [vmem:[%s0 + $0xe0] sm:$0xf]
  %v75 = vld [vmem:[%s0 + $0xe4] sm:$0xf]
  %v76 = vld [vmem:[%s0 + $0xe8] sm:$0xf]
  %v77 = vld [vmem:[%s0 + $0xec] sm:$0xf]
  %v78 = vld [vmem:[%s0 + $0xf0] sm:$0xf]
  %v79 = vld [vmem:[%s0 + $0xf4] sm:$0xf]
  %v80 = vld [vmem:[%s0 + $0xf8] sm:$0xf]
  %v81 = vld [vmem:[%s0 + $0xfc] sm:$0xf]
  %v82 = vld [vmem:[%s1] sm:$0xf]
  %v83 = vld [vmem:[%s1 + $0x4] sm:$0xf]
  %v84 = vld [vmem:[%s1 + $0x8] sm:$0xf]
  %v85 = vld [vmem:[%s1 + $0xc] sm:$0xf]
  %v86 = vld [vmem:[%s1 + $0x10] sm:$0xf]
  %v87 = vld [vmem:[%s1 + $0x14] sm:$0xf]
  %v88 = vld [vmem:[%s1 + $0x18] sm:$0xf]
  %v89 = vld [vmem:[%s1 + $0x1c] sm:$0xf]
  %v154 = vunpack.c.l.b16 %v18
  %v155 = vunpack.c.l.b16 %v19
  %v156 = vunpack.c.l.b16 %v20
  %v157 = vunpack.c.l.b16 %v21
  %v158 = vunpack.c.l.b16 %v22
  %v159 = vunpack.c.l.b16 %v23
  %v160 = vunpack.c.l.b16 %v24
  %v161 = vunpack.c.l.b16 %v25
  %v162 = vunpack.c.l.b16 %v26
  %v163 = vunpack.c.l.b16 %v27
  %v164 = vunpack.c.l.b16 %v28
  %v165 = vunpack.c.l.b16 %v29
  %v166 = vunpack.c.l.b16 %v30
  %v167 = vunpack.c.l.b16 %v31
  %v168 = vunpack.c.l.b16 %v32
  %v169 = vunpack.c.l.b16 %v33
  %v170 = vunpack.c.l.b16 %v34
  %v171 = vunpack.c.l.b16 %v35
  %v172 = vunpack.c.l.b16 %v36
  %v173 = vunpack.c.l.b16 %v37
  %v174 = vunpack.c.l.b16 %v38
  %v175 = vunpack.c.l.b16 %v39
  %v176 = vunpack.c.l.b16 %v40
  %v177 = vunpack.c.l.b16 %v41
  %v178 = vunpack.c.l.b16 %v42
  %v179 = vunpack.c.l.b16 %v43
  %v180 = vunpack.c.l.b16 %v44
  %v181 = vunpack.c.l.b16 %v45
  %v182 = vunpack.c.l.b16 %v46
  %v183 = vunpack.c.l.b16 %v47
  %v184 = vunpack.c.l.b16 %v48
  %v185 = vunpack.c.l.b16 %v49
  %v186 = vunpack.c.l.b16 %v50
  %v187 = vunpack.c.l.b16 %v51
  %v188 = vunpack.c.l.b16 %v52
  %v189 = vunpack.c.l.b16 %v53
  %v190 = vunpack.c.l.b16 %v54
  %v191 = vunpack.c.l.b16 %v55
  %v192 = vunpack.c.l.b16 %v56
  %v193 = vunpack.c.l.b16 %v57
  %v194 = vunpack.c.l.b16 %v58
  %v195 = vunpack.c.l.b16 %v59
  %v196 = vunpack.c.l.b16 %v60
  %v197 = vunpack.c.l.b16 %v61
  %v198 = vunpack.c.l.b16 %v62
  %v199 = vunpack.c.l.b16 %v63
  %v200 = vunpack.c.l.b16 %v64
  %v201 = vunpack.c.l.b16 %v65
  %v202 = vunpack.c.l.b16 %v66
  %v203 = vunpack.c.l.b16 %v67
  %v204 = vunpack.c.l.b16 %v68
  %v205 = vunpack.c.l.b16 %v69
  %v206 = vunpack.c.l.b16 %v70
  %v207 = vunpack.c.l.b16 %v71
  %v208 = vunpack.c.l.b16 %v72
  %v209 = vunpack.c.l.b16 %v73
  %v210 = vunpack.c.l.b16 %v74
  %v211 = vunpack.c.l.b16 %v75
  %v212 = vunpack.c.l.b16 %v76
  %v213 = vunpack.c.l.b16 %v77
  %v214 = vunpack.c.l.b16 %v78
  %v215 = vunpack.c.l.b16 %v79
  %v216 = vunpack.c.l.b16 %v80
  %v217 = vunpack.c.l.b16 %v81
  %v218 = vpack.c.b16 %v155, %v154
  %v219 = vpack.c.b16 %v157, %v156
  %v220 = vpack.c.b16 %v159, %v158
  %v221 = vpack.c.b16 %v161, %v160
  %v222 = vpack.c.b16 %v163, %v162
  %v223 = vpack.c.b16 %v165, %v164
  %v224 = vpack.c.b16 %v167, %v166
  %v225 = vpack.c.b16 %v169, %v168
  %v226 = vpack.c.b16 %v171, %v170
  %v227 = vpack.c.b16 %v173, %v172
  %v228 = vpack.c.b16 %v175, %v174
  %v229 = vpack.c.b16 %v177, %v176
  %v230 = vpack.c.b16 %v179, %v178
  %v231 = vpack.c.b16 %v181, %v180
  %v232 = vpack.c.b16 %v183, %v182
  %v233 = vpack.c.b16 %v185, %v184
  %v234 = vpack.c.b16 %v187, %v186
  %v235 = vpack.c.b16 %v189, %v188
  %v236 = vpack.c.b16 %v191, %v190
  %v237 = vpack.c.b16 %v193, %v192
  %v238 = vpack.c.b16 %v195, %v194
  %v239 = vpack.c.b16 %v197, %v196
  %v240 = vpack.c.b16 %v199, %v198
  %v241 = vpack.c.b16 %v201, %v200
  %v242 = vpack.c.b16 %v203, %v202
  %v243 = vpack.c.b16 %v205, %v204
  %v244 = vpack.c.b16 %v207, %v206
  %v245 = vpack.c.b16 %v209, %v208
  %v246 = vpack.c.b16 %v211, %v210
  %v247 = vpack.c.b16 %v213, %v212
  %v248 = vpack.c.b16 %v215, %v214
  %v249 = vpack.c.b16 %v217, %v216
  %v258 = vunpack.c.l.b16 %v82
  %v259 = vunpack.c.l.b16 %v83
  %v260 = vunpack.c.l.b16 %v84
  %v261 = vunpack.c.l.b16 %v85
  %v262 = vunpack.c.l.b16 %v86
  %v263 = vunpack.c.l.b16 %v87
  %v264 = vunpack.c.l.b16 %v88
  %v265 = vunpack.c.l.b16 %v89
  %v266 = vpack.c.b16 %v259, %v258
  %v267 = vpack.c.b16 %v261, %v260
  %v268 = vpack.c.b16 %v263, %v262
  %v269 = vpack.c.b16 %v265, %v264
  %vm274 = vcmask 523264
  %v276 = vsel %vm274, %v218, 0
  %v279 = vsel %vm274, %v219, 0
  %v282 = vsel %vm274, %v220, 0
  %v285 = vsel %vm274, %v221, 0
  %v288 = vsel %vm274, %v222, 0
  %v291 = vsel %vm274, %v223, 0
  %v294 = vsel %vm274, %v224, 0
  %v297 = vsel %vm274, %v225, 0
  %v300 = vsel %vm274, %v226, 0
  %v303 = vsel %vm274, %v227, 0
  %v306 = vsel %vm274, %v228, 0
  %v309 = vsel %vm274, %v229, 0
  %v312 = vsel %vm274, %v230, 0
  %v315 = vsel %vm274, %v231, 0
  %v318 = vsel %vm274, %v232, 0
  %v321 = vsel %vm274, %v233, 0
  %v324 = vsel %vm274, %v234, 0
  %v327 = vsel %vm274, %v235, 0
  %v330 = vsel %vm274, %v236, 0
  %v333 = vsel %vm274, %v237, 0
  %v336 = vsel %vm274, %v238, 0
  %v339 = vsel %vm274, %v239, 0
  %v342 = vsel %vm274, %v240, 0
  %v345 = vsel %vm274, %v241, 0
  %v348 = vsel %vm274, %v242, 0
  %v351 = vsel %vm274, %v243, 0
  %v354 = vsel %vm274, %v244, 0
  %v357 = vsel %vm274, %v245, 0
  %v360 = vsel %vm274, %v246, 0
  %v363 = vsel %vm274, %v247, 0
  %v366 = vsel %vm274, %v248, 0
  %v369 = vsel %vm274, %v249, 0
  %371 = vmatprep.subr.bf16.mxu0 0
  %372 = vmatpush1.bf16.msra.mxu0 0
  %373 = vmatprep.subr.bf16.mxu0 0
  %374 = vmatpush1.bf16.msra.mxu0 0
  %375 = vmatprep.subr.bf16.mxu0 0
  %376 = vmatpush1.bf16.msra.mxu0 0
  %377 = vmatprep.subr.bf16.mxu0 0
  %378 = vmatpush1.bf16.msra.mxu0 0
  %379 = vmatprep.subr.bf16.mxu0 0
  %380 = vmatpush1.bf16.msra.mxu0 %v269
  %381 = vmatprep.subr.bf16.mxu0 0
  %382 = vmatpush1.bf16.msra.mxu0 %v268
  %383 = vmatprep.subr.bf16.mxu0 0
  %384 = vmatpush1.bf16.msra.mxu0 %v267
  %385 = vmatprep.subr.bf16.mxu0 0
  %386 = vmatpush1.bf16.msra.mxu0 %v266
  %387 = vmatprep.subr.bf16.mxu0 0
  %388 = vmatpush2.bf16.msra.mxu0 0
  %389 = vmatprep.subr.bf16.mxu0 0
  %390 = vmatpush2.bf16.msra.mxu0 0
  %391 = vmatprep.subr.bf16.mxu0 0
  %392 = vmatpush2.bf16.msra.mxu0 0
  %393 = vmatprep.subr.bf16.mxu0 0
  %394 = vmatpush2.bf16.msra.mxu0 0
  %395 = vmatprep.subr.bf16.mxu0 0
  %396 = vmatpush2.bf16.msra.mxu0 0
  %397 = vmatprep.subr.bf16.mxu0 0
  %398 = vmatpush2.bf16.msra.mxu0 0
  %399 = vmatprep.subr.bf16.mxu0 0
  %400 = vmatpush2.bf16.msra.mxu0 0
  %401 = vmatprep.subr.bf16.mxu0 0
  %402 = vmatpush2.bf16.msra.mxu0 0
  %403 = vmatprep.mubr.bf16.mxu0 0
  %404 = vmatmul.mubr.bf16.gmra.mxu0 %v276
  %v405 = vpop.f32.mrf.mxu0
  %v406 = vadd.f32 0.0, %v405
  %v407 = vpop.f32.mrf.mxu0
  %v408 = vpop.f32.mrf.mxu0
  %v409 = vadd.f32 0.0, %v408
  %v410 = vpop.f32.mrf.mxu0
  %411 = vmatprep.mubr.bf16.mxu0 0
  %412 = vmatmul.mubr.bf16.gmra.mxu0 %v279
  %v413 = vpop.f32.mrf.mxu0
  %v414 = vadd.f32 0.0, %v413
  %v415 = vpop.f32.mrf.mxu0
  %v416 = vpop.f32.mrf.mxu0
  %v417 = vadd.f32 0.0, %v416
  %v418 = vpop.f32.mrf.mxu0
  %419 = vmatprep.mubr.bf16.mxu0 0
  %420 = vmatmul.mubr.bf16.gmra.mxu0 %v282
  %v421 = vpop.f32.mrf.mxu0
  %v422 = vadd.f32 0.0, %v421
  %v423 = vpop.f32.mrf.mxu0
  %v424 = vpop.f32.mrf.mxu0
  %v425 = vadd.f32 0.0, %v424
  %v426 = vpop.f32.mrf.mxu0
  %427 = vmatprep.mubr.bf16.mxu0 0
  %428 = vmatmul.mubr.bf16.gmra.mxu0 %v285
  %v429 = vpop.f32.mrf.mxu0
  %v430 = vadd.f32 0.0, %v429
  %v431 = vpop.f32.mrf.mxu0
  %v432 = vpop.f32.mrf.mxu0
  %v433 = vadd.f32 0.0, %v432
  %v434 = vpop.f32.mrf.mxu0
  %435 = vmatprep.mubr.bf16.mxu0 0
  %436 = vmatmul.mubr.bf16.gmra.mxu0 %v288
  %v437 = vpop.f32.mrf.mxu0
  %v438 = vadd.f32 0.0, %v437
  %v439 = vpop.f32.mrf.mxu0
  %v440 = vpop.f32.mrf.mxu0
  %v441 = vadd.f32 0.0, %v440
  %v442 = vpop.f32.mrf.mxu0
  %443 = vmatprep.mubr.bf16.mxu0 0
  %444 = vmatmul.mubr.bf16.gmra.mxu0 %v291
  %v445 = vpop.f32.mrf.mxu0
  %v446 = vadd.f32 0.0, %v445
  %v447 = vpop.f32.mrf.mxu0
  %v448 = vpop.f32.mrf.mxu0
  %v449 = vadd.f32 0.0, %v448
  %v450 = vpop.f32.mrf.mxu0
  %451 = vmatprep.mubr.bf16.mxu0 0
  %452 = vmatmul.mubr.bf16.gmra.mxu0 %v294
  %v453 = vpop.f32.mrf.mxu0
  %v454 = vadd.f32 0.0, %v453
  %v455 = vpop.f32.mrf.mxu0
  %v456 = vpop.f32.mrf.mxu0
  %v457 = vadd.f32 0.0, %v456
  %v458 = vpop.f32.mrf.mxu0
  %459 = vmatprep.mubr.bf16.mxu0 0
  %460 = vmatmul.mubr.bf16.gmra.mxu0 %v297
  %v461 = vpop.f32.mrf.mxu0
  %v462 = vadd.f32 0.0, %v461
  %v463 = vpop.f32.mrf.mxu0
  %v464 = vpop.f32.mrf.mxu0
  %v465 = vadd.f32 0.0, %v464
  %v466 = vpop.f32.mrf.mxu0
  %467 = vmatprep.mubr.bf16.mxu0 0
  %468 = vmatmul.mubr.bf16.gmra.mxu0 %v300
  %v469 = vpop.f32.mrf.mxu0
  %v470 = vadd.f32 0.0, %v469
  %v471 = vpop.f32.mrf.mxu0
  %v472 = vpop.f32.mrf.mxu0
  %v473 = vadd.f32 0.0, %v472
  %v474 = vpop.f32.mrf.mxu0
  %475 = vmatprep.mubr.bf16.mxu0 0
  %476 = vmatmul.mubr.bf16.gmra.mxu0 %v303
  %v477 = vpop.f32.mrf.mxu0
  %v478 = vadd.f32 0.0, %v477
  %v479 = vpop.f32.mrf.mxu0
  %v480 = vpop.f32.mrf.mxu0
  %v481 = vadd.f32 0.0, %v480
  %v482 = vpop.f32.mrf.mxu0
  %483 = vmatprep.mubr.bf16.mxu0 0
  %484 = vmatmul.mubr.bf16.gmra.mxu0 %v306
  %v485 = vpop.f32.mrf.mxu0
  %v486 = vadd.f32 0.0, %v485
  %v487 = vpop.f32.mrf.mxu0
  %v488 = vpop.f32.mrf.mxu0
  %v489 = vadd.f32 0.0, %v488
  %v490 = vpop.f32.mrf.mxu0
  %491 = vmatprep.mubr.bf16.mxu0 0
  %492 = vmatmul.mubr.bf16.gmra.mxu0 %v309
  %v493 = vpop.f32.mrf.mxu0
  %v494 = vadd.f32 0.0, %v493
  %v495 = vpop.f32.mrf.mxu0
  %v496 = vpop.f32.mrf.mxu0
  %v497 = vadd.f32 0.0, %v496
  %v498 = vpop.f32.mrf.mxu0
  %499 = vmatprep.mubr.bf16.mxu0 0
  %500 = vmatmul.mubr.bf16.gmra.mxu0 %v312
  %v501 = vpop.f32.mrf.mxu0
  %v502 = vadd.f32 0.0, %v501
  %v503 = vpop.f32.mrf.mxu0
  %v504 = vpop.f32.mrf.mxu0
  %v505 = vadd.f32 0.0, %v504
  %v506 = vpop.f32.mrf.mxu0
  %507 = vmatprep.mubr.bf16.mxu0 0
  %508 = vmatmul.mubr.bf16.gmra.mxu0 %v315
  %v509 = vpop.f32.mrf.mxu0
  %v510 = vadd.f32 0.0, %v509
  %v511 = vpop.f32.mrf.mxu0
  %v512 = vpop.f32.mrf.mxu0
  %v513 = vadd.f32 0.0, %v512
  %v514 = vpop.f32.mrf.mxu0
  %515 = vmatprep.mubr.bf16.mxu0 0
  %516 = vmatmul.mubr.bf16.gmra.mxu0 %v318
  %v517 = vpop.f32.mrf.mxu0
  %v518 = vadd.f32 0.0, %v517
  %v519 = vpop.f32.mrf.mxu0
  %v520 = vpop.f32.mrf.mxu0
  %v521 = vadd.f32 0.0, %v520
  %v522 = vpop.f32.mrf.mxu0
  %523 = vmatprep.mubr.bf16.mxu0 0
  %524 = vmatmul.mubr.bf16.gmra.mxu0 %v321
  %v525 = vpop.f32.mrf.mxu0
  %v526 = vadd.f32 0.0, %v525
  %v527 = vpop.f32.mrf.mxu0
  %v528 = vpop.f32.mrf.mxu0
  %v529 = vadd.f32 0.0, %v528
  %v530 = vpop.f32.mrf.mxu0
  %531 = vmatprep.mubr.bf16.mxu0 0
  %532 = vmatmul.mubr.bf16.gmra.mxu0 %v324
  %v533 = vpop.f32.mrf.mxu0
  %v534 = vadd.f32 0.0, %v533
  %v535 = vpop.f32.mrf.mxu0
  %v536 = vpop.f32.mrf.mxu0
  %v537 = vadd.f32 0.0, %v536
  %v538 = vpop.f32.mrf.mxu0
  %539 = vmatprep.mubr.bf16.mxu0 0
  %540 = vmatmul.mubr.bf16.gmra.mxu0 %v327
  %v541 = vpop.f32.mrf.mxu0
  %v542 = vadd.f32 0.0, %v541
  %v543 = vpop.f32.mrf.mxu0
  %v544 = vpop.f32.mrf.mxu0
  %v545 = vadd.f32 0.0, %v544
  %v546 = vpop.f32.mrf.mxu0
  %547 = vmatprep.mubr.bf16.mxu0 0
  %548 = vmatmul.mubr.bf16.gmra.mxu0 %v330
  %v549 = vpop.f32.mrf.mxu0
  %v550 = vadd.f32 0.0, %v549
  %v551 = vpop.f32.mrf.mxu0
  %v552 = vpop.f32.mrf.mxu0
  %v553 = vadd.f32 0.0, %v552
  %v554 = vpop.f32.mrf.mxu0
  %555 = vmatprep.mubr.bf16.mxu0 0
  %556 = vmatmul.mubr.bf16.gmra.mxu0 %v333
  %v557 = vpop.f32.mrf.mxu0
  %v558 = vadd.f32 0.0, %v557
  %v559 = vpop.f32.mrf.mxu0
  %v560 = vpop.f32.mrf.mxu0
  %v561 = vadd.f32 0.0, %v560
  %v562 = vpop.f32.mrf.mxu0
  %563 = vmatprep.mubr.bf16.mxu0 0
  %564 = vmatmul.mubr.bf16.gmra.mxu0 %v336
  %v565 = vpop.f32.mrf.mxu0
  %v566 = vadd.f32 0.0, %v565
  %v567 = vpop.f32.mrf.mxu0
  %v568 = vpop.f32.mrf.mxu0
  %v569 = vadd.f32 0.0, %v568
  %v570 = vpop.f32.mrf.mxu0
  %571 = vmatprep.mubr.bf16.mxu0 0
  %572 = vmatmul.mubr.bf16.gmra.mxu0 %v339
  %v573 = vpop.f32.mrf.mxu0
  %v574 = vadd.f32 0.0, %v573
  %v575 = vpop.f32.mrf.mxu0
  %v576 = vpop.f32.mrf.mxu0
  %v577 = vadd.f32 0.0, %v576
  %v578 = vpop.f32.mrf.mxu0
  %579 = vmatprep.mubr.bf16.mxu0 0
  %580 = vmatmul.mubr.bf16.gmra.mxu0 %v342
  %v581 = vpop.f32.mrf.mxu0
  %v582 = vadd.f32 0.0, %v581
  %v583 = vpop.f32.mrf.mxu0
  %v584 = vpop.f32.mrf.mxu0
  %v585 = vadd.f32 0.0, %v584
  %v586 = vpop.f32.mrf.mxu0
  %587 = vmatprep.mubr.bf16.mxu0 0
  %588 = vmatmul.mubr.bf16.gmra.mxu0 %v345
  %v589 = vpop.f32.mrf.mxu0
  %v590 = vadd.f32 0.0, %v589
  %v591 = vpop.f32.mrf.mxu0
  %v592 = vpop.f32.mrf.mxu0
  %v593 = vadd.f32 0.0, %v592
  %v594 = vpop.f32.mrf.mxu0
  %595 = vmatprep.mubr.bf16.mxu0 0
  %596 = vmatmul.mubr.bf16.gmra.mxu0 %v348
  %v597 = vpop.f32.mrf.mxu0
  %v598 = vadd.f32 0.0, %v597
  %v599 = vpop.f32.mrf.mxu0
  %v600 = vpop.f32.mrf.mxu0
  %v601 = vadd.f32 0.0, %v600
  %v602 = vpop.f32.mrf.mxu0
  %603 = vmatprep.mubr.bf16.mxu0 0
  %604 = vmatmul.mubr.bf16.gmra.mxu0 %v351
  %v605 = vpop.f32.mrf.mxu0
  %v606 = vadd.f32 0.0, %v605
  %v607 = vpop.f32.mrf.mxu0
  %v608 = vpop.f32.mrf.mxu0
  %v609 = vadd.f32 0.0, %v608
  %v610 = vpop.f32.mrf.mxu0
  %611 = vmatprep.mubr.bf16.mxu0 0
  %612 = vmatmul.mubr.bf16.gmra.mxu0 %v354
  %v613 = vpop.f32.mrf.mxu0
  %v614 = vadd.f32 0.0, %v613
  %v615 = vpop.f32.mrf.mxu0
  %v616 = vpop.f32.mrf.mxu0
  %v617 = vadd.f32 0.0, %v616
  %v618 = vpop.f32.mrf.mxu0
  %619 = vmatprep.mubr.bf16.mxu0 0
  %620 = vmatmul.mubr.bf16.gmra.mxu0 %v357
  %v621 = vpop.f32.mrf.mxu0
  %v622 = vadd.f32 0.0, %v621
  %v623 = vpop.f32.mrf.mxu0
  %v624 = vpop.f32.mrf.mxu0
  %v625 = vadd.f32 0.0, %v624
  %v626 = vpop.f32.mrf.mxu0
  %627 = vmatprep.mubr.bf16.mxu0 0
  %628 = vmatmul.mubr.bf16.gmra.mxu0 %v360
  %v629 = vpop.f32.mrf.mxu0
  %v630 = vadd.f32 0.0, %v629
  %v631 = vpop.f32.mrf.mxu0
  %v632 = vpop.f32.mrf.mxu0
  %v633 = vadd.f32 0.0, %v632
  %v634 = vpop.f32.mrf.mxu0
  %635 = vmatprep.mubr.bf16.mxu0 0
  %636 = vmatmul.mubr.bf16.gmra.mxu0 %v363
  %v637 = vpop.f32.mrf.mxu0
  %v638 = vadd.f32 0.0, %v637
  %v639 = vpop.f32.mrf.mxu0
  %v640 = vpop.f32.mrf.mxu0
  %v641 = vadd.f32 0.0, %v640
  %v642 = vpop.f32.mrf.mxu0
  %643 = vmatprep.mubr.bf16.mxu0 0
  %644 = vmatmul.mubr.bf16.gmra.mxu0 %v366
  %v645 = vpop.f32.mrf.mxu0
  %v646 = vadd.f32 0.0, %v645
  %v647 = vpop.f32.mrf.mxu0
  %v648 = vpop.f32.mrf.mxu0
  %v649 = vadd.f32 0.0, %v648
  %v650 = vpop.f32.mrf.mxu0
  %651 = vmatprep.mubr.bf16.mxu0 0
  %652 = vmatmul.mubr.bf16.gmra.mxu0 %v369
  %v653 = vpop.f32.mrf.mxu0
  %v654 = vadd.f32 0.0, %v653
  %v655 = vpop.f32.mrf.mxu0
  %v656 = vpop.f32.mrf.mxu0
  %v657 = vadd.f32 0.0, %v656
  %v658 = vpop.f32.mrf.mxu0
  %659 = vdwg.mxu0
  %v660 = vld [vmem:[%s2] sm:$0x1]
  %v662 = vlaneseq
  %v663 = vshrl.u32 %v662, 7
  %v664 = vsub.s32 0, %v663
  %v665 = vrot.slane %v660, %v664
  %v667 = vmul.f32 %v406, %v665
  %v668 = vmul.f32 %v409, %v665
  %v669 = vmul.f32 %v414, %v665
  %v670 = vmul.f32 %v417, %v665
  %v671 = vmul.f32 %v422, %v665
  %v672 = vmul.f32 %v425, %v665
  %v673 = vmul.f32 %v430, %v665
  %v674 = vmul.f32 %v433, %v665
  %v675 = vmul.f32 %v438, %v665
  %v676 = vmul.f32 %v441, %v665
  %v677 = vmul.f32 %v446, %v665
  %v678 = vmul.f32 %v449, %v665
  %v679 = vmul.f32 %v454, %v665
  %v680 = vmul.f32 %v457, %v665
  %v681 = vmul.f32 %v462, %v665
  %v682 = vmul.f32 %v465, %v665
  %v683 = vmul.f32 %v470, %v665
  %v684 = vmul.f32 %v473, %v665
  %v685 = vmul.f32 %v478, %v665
  %v686 = vmul.f32 %v481, %v665
  %v687 = vmul.f32 %v486, %v665
  %v688 = vmul.f32 %v489, %v665
  %v689 = vmul.f32 %v494, %v665
  %v690 = vmul.f32 %v497, %v665
  %v691 = vmul.f32 %v502, %v665
  %v692 = vmul.f32 %v505, %v665
  %v693 = vmul.f32 %v510, %v665
  %v694 = vmul.f32 %v513, %v665
  %v695 = vmul.f32 %v518, %v665
  %v696 = vmul.f32 %v521, %v665
  %v697 = vmul.f32 %v526, %v665
  %v698 = vmul.f32 %v529, %v665
  %v699 = vmul.f32 %v534, %v665
  %v700 = vmul.f32 %v537, %v665
  %v701 = vmul.f32 %v542, %v665
  %v702 = vmul.f32 %v545, %v665
  %v703 = vmul.f32 %v550, %v665
  %v704 = vmul.f32 %v553, %v665
  %v705 = vmul.f32 %v558, %v665
  %v706 = vmul.f32 %v561, %v665
  %v707 = vmul.f32 %v566, %v665
  %v708 = vmul.f32 %v569, %v665
  %v709 = vmul.f32 %v574, %v665
  %v710 = vmul.f32 %v577, %v665
  %v711 = vmul.f32 %v582, %v665
  %v712 = vmul.f32 %v585, %v665
  %v713 = vmul.f32 %v590, %v665
  %v714 = vmul.f32 %v593, %v665
  %v715 = vmul.f32 %v598, %v665
  %v716 = vmul.f32 %v601, %v665
  %v717 = vmul.f32 %v606, %v665
  %v718 = vmul.f32 %v609, %v665
  %v719 = vmul.f32 %v614, %v665
  %v720 = vmul.f32 %v617, %v665
  %v721 = vmul.f32 %v622, %v665
  %v722 = vmul.f32 %v625, %v665
  %v723 = vmul.f32 %v630, %v665
  %v724 = vmul.f32 %v633, %v665
  %v725 = vmul.f32 %v638, %v665
  %v726 = vmul.f32 %v641, %v665
  %v727 = vmul.f32 %v646, %v665
  %v728 = vmul.f32 %v649, %v665
  %v729 = vmul.f32 %v654, %v665
  %v730 = vmul.f32 %v657, %v665
  %v731 = vld [vmem:[%s3] sm:$0x1]
  %v733 = vlaneseq
  %v734 = vshrl.u32 %v733, 7
  %v735 = vsub.s32 0, %v734
  %v736 = vrot.slane %v731, %v735
  %v738 = vadd.f32 %v667, %v736
  %v739 = vadd.f32 %v668, %v736
  %v740 = vadd.f32 %v669, %v736
  %v741 = vadd.f32 %v670, %v736
  %v742 = vadd.f32 %v671, %v736
  %v743 = vadd.f32 %v672, %v736
  %v744 = vadd.f32 %v673, %v736
  %v745 = vadd.f32 %v674, %v736
  %v746 = vadd.f32 %v675, %v736
  %v747 = vadd.f32 %v676, %v736
  %v748 = vadd.f32 %v677, %v736
  %v749 = vadd.f32 %v678, %v736
  %v750 = vadd.f32 %v679, %v736
  %v751 = vadd.f32 %v680, %v736
  %v752 = vadd.f32 %v681, %v736
  %v753 = vadd.f32 %v682, %v736
  %v754 = vadd.f32 %v683, %v736
  %v755 = vadd.f32 %v684, %v736
  %v756 = vadd.f32 %v685, %v736
  %v757 = vadd.f32 %v686, %v736
  %v758 = vadd.f32 %v687, %v736
  %v759 = vadd.f32 %v688, %v736
  %v760 = vadd.f32 %v689, %v736
  %v761 = vadd.f32 %v690, %v736
  %v762 = vadd.f32 %v691, %v736
  %v763 = vadd.f32 %v692, %v736
  %v764 = vadd.f32 %v693, %v736
  %v765 = vadd.f32 %v694, %v736
  %v766 = vadd.f32 %v695, %v736
  %v767 = vadd.f32 %v696, %v736
  %v768 = vadd.f32 %v697, %v736
  %v769 = vadd.f32 %v698, %v736
  %v770 = vadd.f32 %v699, %v736
  %v771 = vadd.f32 %v700, %v736
  %v772 = vadd.f32 %v701, %v736
  %v773 = vadd.f32 %v702, %v736
  %v774 = vadd.f32 %v703, %v736
  %v775 = vadd.f32 %v704, %v736
  %v776 = vadd.f32 %v705, %v736
  %v777 = vadd.f32 %v706, %v736
  %v778 = vadd.f32 %v707, %v736
  %v779 = vadd.f32 %v708, %v736
  %v780 = vadd.f32 %v709, %v736
  %v781 = vadd.f32 %v710, %v736
  %v782 = vadd.f32 %v711, %v736
  %v783 = vadd.f32 %v712, %v736
  %v784 = vadd.f32 %v713, %v736
  %v785 = vadd.f32 %v714, %v736
  %v786 = vadd.f32 %v715, %v736
  %v787 = vadd.f32 %v716, %v736
  %v788 = vadd.f32 %v717, %v736
  %v789 = vadd.f32 %v718, %v736
  %v790 = vadd.f32 %v719, %v736
  %v791 = vadd.f32 %v720, %v736
  %v792 = vadd.f32 %v721, %v736
  %v793 = vadd.f32 %v722, %v736
  %v794 = vadd.f32 %v723, %v736
  %v795 = vadd.f32 %v724, %v736
  %v796 = vadd.f32 %v725, %v736
  %v797 = vadd.f32 %v726, %v736
  %v798 = vadd.f32 %v727, %v736
  %v799 = vadd.f32 %v728, %v736
  %v800 = vadd.f32 %v729, %v736
  %v801 = vadd.f32 %v730, %v736
  %v802 = vmax.f32 %v738, 0.0
  %v803 = vmax.f32 %v739, 0.0
  %v804 = vmax.f32 %v740, 0.0
  %v805 = vmax.f32 %v741, 0.0
  %v806 = vmax.f32 %v742, 0.0
  %v807 = vmax.f32 %v743, 0.0
  %v808 = vmax.f32 %v744, 0.0
  %v809 = vmax.f32 %v745, 0.0
  %v810 = vmax.f32 %v746, 0.0
  %v811 = vmax.f32 %v747, 0.0
  %v812 = vmax.f32 %v748, 0.0
  %v813 = vmax.f32 %v749, 0.0
  %v814 = vmax.f32 %v750, 0.0
  %v815 = vmax.f32 %v751, 0.0
  %v816 = vmax.f32 %v752, 0.0
  %v817 = vmax.f32 %v753, 0.0
  %v818 = vmax.f32 %v754, 0.0
  %v819 = vmax.f32 %v755, 0.0
  %v820 = vmax.f32 %v756, 0.0
  %v821 = vmax.f32 %v757, 0.0
  %v822 = vmax.f32 %v758, 0.0
  %v823 = vmax.f32 %v759, 0.0
  %v824 = vmax.f32 %v760, 0.0
  %v825 = vmax.f32 %v761, 0.0
  %v826 = vmax.f32 %v762, 0.0
  %v827 = vmax.f32 %v763, 0.0
  %v828 = vmax.f32 %v764, 0.0
  %v829 = vmax.f32 %v765, 0.0
  %v830 = vmax.f32 %v766, 0.0
  %v831 = vmax.f32 %v767, 0.0
  %v832 = vmax.f32 %v768, 0.0
  %v833 = vmax.f32 %v769, 0.0
  %v834 = vmax.f32 %v770, 0.0
  %v835 = vmax.f32 %v771, 0.0
  %v836 = vmax.f32 %v772, 0.0
  %v837 = vmax.f32 %v773, 0.0
  %v838 = vmax.f32 %v774, 0.0
  %v839 = vmax.f32 %v775, 0.0
  %v840 = vmax.f32 %v776, 0.0
  %v841 = vmax.f32 %v777, 0.0
  %v842 = vmax.f32 %v778, 0.0
  %v843 = vmax.f32 %v779, 0.0
  %v844 = vmax.f32 %v780, 0.0
  %v845 = vmax.f32 %v781, 0.0
  %v846 = vmax.f32 %v782, 0.0
  %v847 = vmax.f32 %v783, 0.0
  %v848 = vmax.f32 %v784, 0.0
  %v849 = vmax.f32 %v785, 0.0
  %v850 = vmax.f32 %v786, 0.0
  %v851 = vmax.f32 %v787, 0.0
  %v852 = vmax.f32 %v788, 0.0
  %v853 = vmax.f32 %v789, 0.0
  %v854 = vmax.f32 %v790, 0.0
  %v855 = vmax.f32 %v791, 0.0
  %v856 = vmax.f32 %v792, 0.0
  %v857 = vmax.f32 %v793, 0.0
  %v858 = vmax.f32 %v794, 0.0
  %v859 = vmax.f32 %v795, 0.0
  %v860 = vmax.f32 %v796, 0.0
  %v861 = vmax.f32 %v797, 0.0
  %v862 = vmax.f32 %v798, 0.0
  %v863 = vmax.f32 %v799, 0.0
  %v864 = vmax.f32 %v800, 0.0
  %v865 = vmax.f32 %v801, 0.0
  %v866 = vpack.c.bf16 %v803, %v802
  %v867 = vpack.c.bf16 %v805, %v804
  %v868 = vpack.c.bf16 %v807, %v806
  %v869 = vpack.c.bf16 %v809, %v808
  %v870 = vpack.c.bf16 %v811, %v810
  %v871 = vpack.c.bf16 %v813, %v812
  %v872 = vpack.c.bf16 %v815, %v814
  %v873 = vpack.c.bf16 %v817, %v816
  %v874 = vpack.c.bf16 %v819, %v818
  %v875 = vpack.c.bf16 %v821, %v820
  %v876 = vpack.c.bf16 %v823, %v822
  %v877 = vpack.c.bf16 %v825, %v824
  %v878 = vpack.c.bf16 %v827, %v826
  %v879 = vpack.c.bf16 %v829, %v828
  %v880 = vpack.c.bf16 %v831, %v830
  %v881 = vpack.c.bf16 %v833, %v832
  %v882 = vpack.c.bf16 %v835, %v834
  %v883 = vpack.c.bf16 %v837, %v836
  %v884 = vpack.c.bf16 %v839, %v838
  %v885 = vpack.c.bf16 %v841, %v840
  %v886 = vpack.c.bf16 %v843, %v842
  %v887 = vpack.c.bf16 %v845, %v844
  %v888 = vpack.c.bf16 %v847, %v846
  %v889 = vpack.c.bf16 %v849, %v848
  %v890 = vpack.c.bf16 %v851, %v850
  %v891 = vpack.c.bf16 %v853, %v852
  %v892 = vpack.c.bf16 %v855, %v854
  %v893 = vpack.c.bf16 %v857, %v856
  %v894 = vpack.c.bf16 %v859, %v858
  %v895 = vpack.c.bf16 %v861, %v860
  %v896 = vpack.c.bf16 %v863, %v862
  %v897 = vpack.c.bf16 %v865, %v864
  %v930 = vunpack.c.l.b16 %v866
  %v931 = vunpack.c.h.b16 %v866
  %v932 = vunpack.c.l.b16 %v867
  %v933 = vunpack.c.h.b16 %v867
  %v934 = vunpack.c.l.b16 %v868
  %v935 = vunpack.c.h.b16 %v868
  %v936 = vunpack.c.l.b16 %v869
  %v937 = vunpack.c.h.b16 %v869
  %v938 = vunpack.c.l.b16 %v870
  %v939 = vunpack.c.h.b16 %v870
  %v940 = vunpack.c.l.b16 %v871
  %v941 = vunpack.c.h.b16 %v871
  %v942 = vunpack.c.l.b16 %v872
  %v943 = vunpack.c.h.b16 %v872
  %v944 = vunpack.c.l.b16 %v873
  %v945 = vunpack.c.h.b16 %v873
  %v946 = vunpack.c.l.b16 %v874
  %v947 = vunpack.c.h.b16 %v874
  %v948 = vunpack.c.l.b16 %v875
  %v949 = vunpack.c.h.b16 %v875
  %v950 = vunpack.c.l.b16 %v876
  %v951 = vunpack.c.h.b16 %v876
  %v952 = vunpack.c.l.b16 %v877
  %v953 = vunpack.c.h.b16 %v877
  %v954 = vunpack.c.l.b16 %v878
  %v955 = vunpack.c.h.b16 %v878
  %v956 = vunpack.c.l.b16 %v879
  %v957 = vunpack.c.h.b16 %v879
  %v958 = vunpack.c.l.b16 %v880
  %v959 = vunpack.c.h.b16 %v880
  %v960 = vunpack.c.l.b16 %v881
  %v961 = vunpack.c.h.b16 %v881
  %v962 = vunpack.c.l.b16 %v882
  %v963 = vunpack.c.h.b16 %v882
  %v964 = vunpack.c.l.b16 %v883
  %v965 = vunpack.c.h.b16 %v883
  %v966 = vunpack.c.l.b16 %v884
  %v967 = vunpack.c.h.b16 %v884
  %v968 = vunpack.c.l.b16 %v885
  %v969 = vunpack.c.h.b16 %v885
  %v970 = vunpack.c.l.b16 %v886
  %v971 = vunpack.c.h.b16 %v886
  %v972 = vunpack.c.l.b16 %v887
  %v973 = vunpack.c.h.b16 %v887
  %v974 = vunpack.c.l.b16 %v888
  %v975 = vunpack.c.h.b16 %v888
  %v976 = vunpack.c.l.b16 %v889
  %v977 = vunpack.c.h.b16 %v889
  %v978 = vunpack.c.l.b16 %v890
  %v979 = vunpack.c.h.b16 %v890
  %v980 = vunpack.c.l.b16 %v891
  %v981 = vunpack.c.h.b16 %v891
  %v982 = vunpack.c.l.b16 %v892
  %v983 = vunpack.c.h.b16 %v892
  %v984 = vunpack.c.l.b16 %v893
  %v985 = vunpack.c.h.b16 %v893
  %v986 = vunpack.c.l.b16 %v894
  %v987 = vunpack.c.h.b16 %v894
  %v988 = vunpack.c.l.b16 %v895
  %v989 = vunpack.c.h.b16 %v895
  %v990 = vunpack.c.l.b16 %v896
  %v991 = vunpack.c.h.b16 %v896
  %v992 = vunpack.c.l.b16 %v897
  %v993 = vunpack.c.h.b16 %v897
  %v994 = vpack.c.b16 %v930, %v930
  %v995 = vpack.c.b16 %v931, %v931
  %v996 = vpack.c.b16 %v932, %v932
  %v997 = vpack.c.b16 %v933, %v933
  %v998 = vpack.c.b16 %v934, %v934
  %v999 = vpack.c.b16 %v935, %v935
  %v1000 = vpack.c.b16 %v936, %v936
  %v1001 = vpack.c.b16 %v937, %v937
  %v1002 = vpack.c.b16 %v938, %v938
  %v1003 = vpack.c.b16 %v939, %v939
  %v1004 = vpack.c.b16 %v940, %v940
  %v1005 = vpack.c.b16 %v941, %v941
  %v1006 = vpack.c.b16 %v942, %v942
  %v1007 = vpack.c.b16 %v943, %v943
  %v1008 = vpack.c.b16 %v944, %v944
  %v1009 = vpack.c.b16 %v945, %v945
  %v1010 = vpack.c.b16 %v946, %v946
  %v1011 = vpack.c.b16 %v947, %v947
  %v1012 = vpack.c.b16 %v948, %v948
  %v1013 = vpack.c.b16 %v949, %v949
  %v1014 = vpack.c.b16 %v950, %v950
  %v1015 = vpack.c.b16 %v951, %v951
  %v1016 = vpack.c.b16 %v952, %v952
  %v1017 = vpack.c.b16 %v953, %v953
  %v1018 = vpack.c.b16 %v954, %v954
  %v1019 = vpack.c.b16 %v955, %v955
  %v1020 = vpack.c.b16 %v956, %v956
  %v1021 = vpack.c.b16 %v957, %v957
  %v1022 = vpack.c.b16 %v958, %v958
  %v1023 = vpack.c.b16 %v959, %v959
  %v1024 = vpack.c.b16 %v960, %v960
  %v1025 = vpack.c.b16 %v961, %v961
  %v1026 = vpack.c.b16 %v962, %v962
  %v1027 = vpack.c.b16 %v963, %v963
  %v1028 = vpack.c.b16 %v964, %v964
  %v1029 = vpack.c.b16 %v965, %v965
  %v1030 = vpack.c.b16 %v966, %v966
  %v1031 = vpack.c.b16 %v967, %v967
  %v1032 = vpack.c.b16 %v968, %v968
  %v1033 = vpack.c.b16 %v969, %v969
  %v1034 = vpack.c.b16 %v970, %v970
  %v1035 = vpack.c.b16 %v971, %v971
  %v1036 = vpack.c.b16 %v972, %v972
  %v1037 = vpack.c.b16 %v973, %v973
  %v1038 = vpack.c.b16 %v974, %v974
  %v1039 = vpack.c.b16 %v975, %v975
  %v1040 = vpack.c.b16 %v976, %v976
  %v1041 = vpack.c.b16 %v977, %v977
  %v1042 = vpack.c.b16 %v978, %v978
  %v1043 = vpack.c.b16 %v979, %v979
  %v1044 = vpack.c.b16 %v980, %v980
  %v1045 = vpack.c.b16 %v981, %v981
  %v1046 = vpack.c.b16 %v982, %v982
  %v1047 = vpack.c.b16 %v983, %v983
  %v1048 = vpack.c.b16 %v984, %v984
  %v1049 = vpack.c.b16 %v985, %v985
  %v1050 = vpack.c.b16 %v986, %v986
  %v1051 = vpack.c.b16 %v987, %v987
  %v1052 = vpack.c.b16 %v988, %v988
  %v1053 = vpack.c.b16 %v989, %v989
  %v1054 = vpack.c.b16 %v990, %v990
  %v1055 = vpack.c.b16 %v991, %v991
  %v1056 = vpack.c.b16 %v992, %v992
  %v1057 = vpack.c.b16 %v993, %v993
  %vm1122 = vcmask 125952
  %1123 = vst.msk [vmem:[%s4] sm:$0xf] %vm1122, %v994
  %1124 = vst.msk [vmem:[%s4 + $0x4] sm:$0xf] %vm1122, %v995
  %1125 = vst.msk [vmem:[%s4 + $0x8] sm:$0xf] %vm1122, %v996
  %1126 = vst.msk [vmem:[%s4 + $0xc] sm:$0xf] %vm1122, %v997
  %1127 = vst.msk [vmem:[%s4 + $0x10] sm:$0xf] %vm1122, %v998
  %1128 = vst.msk [vmem:[%s4 + $0x14] sm:$0xf] %vm1122, %v999
  %1129 = vst.msk [vmem:[%s4 + $0x18] sm:$0xf] %vm1122, %v1000
  %1130 = vst.msk [vmem:[%s4 + $0x1c] sm:$0xf] %vm1122, %v1001
  %1131 = vst.msk [vmem:[%s4 + $0x20] sm:$0xf] %vm1122, %v1002
  %1132 = vst.msk [vmem:[%s4 + $0x24] sm:$0xf] %vm1122, %v1003
  %1133 = vst.msk [vmem:[%s4 + $0x28] sm:$0xf] %vm1122, %v1004
  %1134 = vst.msk [vmem:[%s4 + $0x2c] sm:$0xf] %vm1122, %v1005
  %1135 = vst.msk [vmem:[%s4 + $0x30] sm:$0xf] %vm1122, %v1006
  %1136 = vst.msk [vmem:[%s4 + $0x34] sm:$0xf] %vm1122, %v1007
  %1137 = vst.msk [vmem:[%s4 + $0x38] sm:$0xf] %vm1122, %v1008
  %1138 = vst.msk [vmem:[%s4 + $0x3c] sm:$0xf] %vm1122, %v1009
  %1139 = vst.msk [vmem:[%s4 + $0x40] sm:$0xf] %vm1122, %v1010
  %1140 = vst.msk [vmem:[%s4 + $0x44] sm:$0xf] %vm1122, %v1011
  %1141 = vst.msk [vmem:[%s4 + $0x48] sm:$0xf] %vm1122, %v1012
  %1142 = vst.msk [vmem:[%s4 + $0x4c] sm:$0xf] %vm1122, %v1013
  %1143 = vst.msk [vmem:[%s4 + $0x50] sm:$0xf] %vm1122, %v1014
  %1144 = vst.msk [vmem:[%s4 + $0x54] sm:$0xf] %vm1122, %v1015
  %1145 = vst.msk [vmem:[%s4 + $0x58] sm:$0xf] %vm1122, %v1016
  %1146 = vst.msk [vmem:[%s4 + $0x5c] sm:$0xf] %vm1122, %v1017
  %1147 = vst.msk [vmem:[%s4 + $0x60] sm:$0xf] %vm1122, %v1018
  %1148 = vst.msk [vmem:[%s4 + $0x64] sm:$0xf] %vm1122, %v1019
  %1149 = vst.msk [vmem:[%s4 + $0x68] sm:$0xf] %vm1122, %v1020
  %1150 = vst.msk [vmem:[%s4 + $0x6c] sm:$0xf] %vm1122, %v1021
  %1151 = vst.msk [vmem:[%s4 + $0x70] sm:$0xf] %vm1122, %v1022
  %1152 = vst.msk [vmem:[%s4 + $0x74] sm:$0xf] %vm1122, %v1023
  %1153 = vst.msk [vmem:[%s4 + $0x78] sm:$0xf] %vm1122, %v1024
  %1154 = vst.msk [vmem:[%s4 + $0x7c] sm:$0xf] %vm1122, %v1025
  %1155 = vst.msk [vmem:[%s4 + $0x80] sm:$0xf] %vm1122, %v1026
  %1156 = vst.msk [vmem:[%s4 + $0x84] sm:$0xf] %vm1122, %v1027
  %1157 = vst.msk [vmem:[%s4 + $0x88] sm:$0xf] %vm1122, %v1028
  %1158 = vst.msk [vmem:[%s4 + $0x8c] sm:$0xf] %vm1122, %v1029
  %1159 = vst.msk [vmem:[%s4 + $0x90] sm:$0xf] %vm1122, %v1030
  %1160 = vst.msk [vmem:[%s4 + $0x94] sm:$0xf] %vm1122, %v1031
  %1161 = vst.msk [vmem:[%s4 + $0x98] sm:$0xf] %vm1122, %v1032
  %1162 = vst.msk [vmem:[%s4 + $0x9c] sm:$0xf] %vm1122, %v1033
  %1163 = vst.msk [vmem:[%s4 + $0xa0] sm:$0xf] %vm1122, %v1034
  %1164 = vst.msk [vmem:[%s4 + $0xa4] sm:$0xf] %vm1122, %v1035
  %1165 = vst.msk [vmem:[%s4 + $0xa8] sm:$0xf] %vm1122, %v1036
  %1166 = vst.msk [vmem:[%s4 + $0xac] sm:$0xf] %vm1122, %v1037
  %1167 = vst.msk [vmem:[%s4 + $0xb0] sm:$0xf] %vm1122, %v1038
  %1168 = vst.msk [vmem:[%s4 + $0xb4] sm:$0xf] %vm1122, %v1039
  %1169 = vst.msk [vmem:[%s4 + $0xb8] sm:$0xf] %vm1122, %v1040
  %1170 = vst.msk [vmem:[%s4 + $0xbc] sm:$0xf] %vm1122, %v1041
  %1171 = vst.msk [vmem:[%s4 + $0xc0] sm:$0xf] %vm1122, %v1042
  %1172 = vst.msk [vmem:[%s4 + $0xc4] sm:$0xf] %vm1122, %v1043
  %1173 = vst.msk [vmem:[%s4 + $0xc8] sm:$0xf] %vm1122, %v1044
  %1174 = vst.msk [vmem:[%s4 + $0xcc] sm:$0xf] %vm1122, %v1045
  %1175 = vst.msk [vmem:[%s4 + $0xd0] sm:$0xf] %vm1122, %v1046
  %1176 = vst.msk [vmem:[%s4 + $0xd4] sm:$0xf] %vm1122, %v1047
  %1177 = vst.msk [vmem:[%s4 + $0xd8] sm:$0xf] %vm1122, %v1048
  %1178 = vst.msk [vmem:[%s4 + $0xdc] sm:$0xf] %vm1122, %v1049
  %1179 = vst.msk [vmem:[%s4 + $0xe0] sm:$0xf] %vm1122, %v1050
  %1180 = vst.msk [vmem:[%s4 + $0xe4] sm:$0xf] %vm1122, %v1051
  %1181 = vst.msk [vmem:[%s4 + $0xe8] sm:$0xf] %vm1122, %v1052
  %1182 = vst.msk [vmem:[%s4 + $0xec] sm:$0xf] %vm1122, %v1053
  %1183 = vst.msk [vmem:[%s4 + $0xf0] sm:$0xf] %vm1122, %v1054
  %1184 = vst.msk [vmem:[%s4 + $0xf4] sm:$0xf] %vm1122, %v1055
  %1185 = vst.msk [vmem:[%s4 + $0xf8] sm:$0xf] %vm1122, %v1056
  %1186 = vst.msk [vmem:[%s4 + $0xfc] sm:$0xf] %vm1122, %v1057
  // Predicated region
  $region18: #{tpu_custom_call.1} parent=0 // pred_check
    _
  $region19: #{tpu_custom_call.1} parent=0 // pred_check_branch
    %1188 = sbr.rel (0) target = $region21
  $region20: #{tpu_custom_call.1} parent=0 // pred_region
    _
  $region21: #{tpu_custom_call.1} parent=0 // pred_fallthru
    _
  // Predicated region
  $region22: #{tpu_custom_call.1} parent=0 // pred_check
    _
  $region23: #{tpu_custom_call.1} parent=0 // pred_check_branch
    %1190 = sbr.rel (0) target = $region25
  $region24: #{tpu_custom_call.1} parent=0 // pred_region
    _
  $region25: #{tpu_custom_call.1} parent=0 // pred_fallthru
    _

</llo_original>
